<compile_context>
chip_gen: v6e
topology: v6e:2x2x1
jax: 0.10.0
libtpu: 0.0.40
codegen_flags: <defaults>
</compile_context>

<pallas_src>
import functools
import math

import jax
import jax.numpy as jnp
from jax.experimental import pallas as pl
from jax.experimental.pallas import tpu as pltpu

_EPS = 1e-5


# --------------------------------------------------------------------------
# One Mixer layer on a (block_b, P, C) f32 activation block (shared by both
# kernel variants).  GEMM weights are bf16, stats/biases/residuals are f32.
# --------------------------------------------------------------------------
def _mixer_layer(x, w1, w2, w3t, w4t, b1, pp, cp, b3, *,
                 block_b, patch, channel, hidden):
    f32 = jnp.float32
    bf16 = jnp.bfloat16

    # Unpack the packed small params (static slices, zero cost).
    g1, be1, b2 = pp[:, 0:1], pp[:, 1:2], pp[:, 2:3]          # (P, 1) each
    g2, be2, b4 = cp[0:1, :], cp[1:2, :], cp[2:3, :]          # (1, C) each

    # ------------- token (patch) mixing — no transposes --------------------
    # LayerNorm over the patch axis; independent sum / sum-of-squares.
    inv_p = 1.0 / patch
    s1 = jnp.sum(x, axis=1, keepdims=True)                    # (Bt, 1, C)
    s2 = jnp.sum(x * x, axis=1, keepdims=True)
    mu = s1 * inv_p
    var = jnp.maximum(s2 * inv_p - mu * mu, 0.0)
    xn = (x - mu) * jax.lax.rsqrt(var + _EPS) * g1 + be1
    xn16 = xn.astype(bf16)

    # Fused batched matmuls directly on the (Bt, P, C) layout:
    #   h[b,h,c] = sum_p W1[h,p] xn[b,p,c] ;  y[b,p,c] = sum_h W2[p,h] h[b,h,c]
    w1b = jnp.broadcast_to(w1[None], (block_b, hidden, patch))
    h = jnp.einsum("bhp,bpc->bhc", w1b, xn16,
                   preferred_element_type=f32) + b1            # (Bt, H, C)
    h = jnp.maximum(h, 0.0).astype(bf16)
    w2b = jnp.broadcast_to(w2[None], (block_b, patch, hidden))
    y = jnp.einsum("bph,bhc->bpc", w2b, h,
                   preferred_element_type=f32) + b2            # (Bt, P, C)
    # TODO(synk): nn.Dropout is identity (eval mode); train-mode masking not implemented.
    x = y + x                                                  # residual, f32

    # ------------- channel mixing on collapsed (Bt*P, C) rows --------------
    x2 = x.reshape(block_b * patch, channel)
    inv_c = 1.0 / channel
    s1 = jnp.sum(x2, axis=-1, keepdims=True)
    s2 = jnp.sum(x2 * x2, axis=-1, keepdims=True)
    mu = s1 * inv_c
    var = jnp.maximum(s2 * inv_c - mu * mu, 0.0)
    xn = (x2 - mu) * jax.lax.rsqrt(var + _EPS) * g2 + be2
    h = jnp.dot(xn.astype(bf16), w3t, preferred_element_type=f32) + b3
    h = jnp.maximum(h, 0.0).astype(bf16)
    y = jnp.dot(h, w4t, preferred_element_type=f32) + b4
    return (y + x2).reshape(block_b, patch, channel)


# --------------------------------------------------------------------------
# Kernel variant 1: per-layer weights streamed (grid = (batch_block, layer)).
# --------------------------------------------------------------------------
def _stream_kernel(x_ref, w1_ref, w2_ref, w3t_ref, w4t_ref,
                   b1_ref, pp_ref, cp_ref, b3_ref, o_ref, *,
                   block_b, patch, channel, hidden):
    layer = pl.program_id(1)

    # The output block is resident across the innermost ('arbitrary') layer
    # axis, so it doubles as the f32 residual-stream accumulator.
    @pl.when(layer == 0)
    def _init():
        o_ref[...] = x_ref[...]

    o_ref[...] = _mixer_layer(
        o_ref[...], w1_ref[...], w2_ref[...], w3t_ref[...], w4t_ref[...],
        b1_ref[...], pp_ref[...], cp_ref[...], b3_ref[...],
        block_b=block_b, patch=patch, channel=channel, hidden=hidden)


# --------------------------------------------------------------------------
# Kernel variant 2: full weight stack VMEM-resident (grid = (batch_block,)),
# layers run in an in-kernel fori_loop with dynamic layer indexing.
# --------------------------------------------------------------------------
def _resident_kernel(x_ref, w1_ref, w2_ref, w3t_ref, w4t_ref,
                     b1_ref, pp_ref, cp_ref, b3_ref, o_ref, *,
                     n_layers, block_b, patch, channel, hidden):
    def body(l, x):
        return _mixer_layer(
            x, w1_ref[l], w2_ref[l], w3t_ref[l], w4t_ref[l],
            b1_ref[l], pp_ref[l], cp_ref[l], b3_ref[l],
            block_b=block_b, patch=patch, channel=channel, hidden=hidden)

    o_ref[...] = jax.lax.fori_loop(0, n_layers, body, x_ref[...])


# --------------------------------------------------------------------------
# VMEM budgeting / blocking policy.
# --------------------------------------------------------------------------
def _vmem_capacity_bytes():
    try:
        return int(pltpu.get_tpu_info().vmem_capacity_bytes)
    except Exception:                       # pragma: no cover - be conservative (v7x/TC)
        return 64 * 1024 * 1024


def _per_layer_param_bytes(patch, channel, hidden):
    w = 2 * (hidden * patch + patch * hidden + channel * hidden + hidden * channel)  # bf16
    small = 4 * (hidden + 3 * patch + 3 * channel + hidden)                          # f32
    return w + small


def _per_block_b_bytes(patch, channel, hidden):
    """Rough per-unit-of-block_b VMEM bytes: x/out blocks (double-buffered),
    LN temporaries, hidden activations and the broadcast token weights."""
    act = patch * channel * 4
    est = (6 * act                           # x + out (2 buffers each) + xn/temps (f32)
           + 6 * hidden * channel            # token hidden activations (f32 + bf16)
           + 6 * patch * hidden              # channel hidden activations (f32 + bf16)
           + 4 * hidden * patch)             # broadcast W1/W2 (bf16)
    return int(est * 1.5)                    # headroom


def _pick_block_b(batch, per_b_bytes, act_budget):
    """Largest divisor of `batch` that fits the activation budget, preferring
    >= 2 batch blocks so the 'parallel' axis can shard across TensorCores."""
    max_b = max(1, act_budget // max(per_b_bytes, 1))
    divs = [d for d in range(1, batch + 1) if batch % d == 0 and d <= max_b]
    if not divs:
        return 1
    two_plus = [d for d in divs if batch // d >= 2]
    return max(two_plus) if two_plus else max(divs)


# --------------------------------------------------------------------------
# Wrapper: one fused pallas_call for the whole stack.
# --------------------------------------------------------------------------
def stacked_mixer(x, kp, *, block_b=None, force_variant=None):
    """Apply the whole Mixer stack in one fused pallas_call.

    x:  (B, P, C); kp: layer-stacked kernel params from pack_params()."""
    orig_dtype = x.dtype
    if x.dtype != jnp.float32:
        x = x.astype(jnp.float32)       # keep the cross-layer residual stream in f32
    B, P, C = x.shape
    L, H = kp["w1"].shape[0], kp["w1"].shape[1]

    vmem_cap = _vmem_capacity_bytes()
    budget = int(vmem_cap * 0.85)
    layer_bytes = _per_layer_param_bytes(P, C, H)
    per_b = _per_block_b_bytes(P, C, H)

    # Variant selection: keep the whole weight stack VMEM-resident (weights hit
    # HBM exactly once per call) when it leaves >= half the budget for blocks.
    resident_fixed = 2 * L * layer_bytes    # conservative: assume double-buffered
    stream_fixed = 2 * layer_bytes
    if force_variant is None:
        variant = "resident" if resident_fixed <= budget // 2 else "stream"
    else:
        variant = force_variant
    fixed = resident_fixed if variant == "resident" else stream_fixed

    if block_b is None:
        block_b = _pick_block_b(B, per_b, budget - fixed)
    assert B % block_b == 0, (B, block_b)
    nb = B // block_b

    est = fixed + block_b * per_b
    vmem_limit = int(min(vmem_cap, max(2 * est + (16 << 20), 64 << 20)))

    params = (kp["w1"], kp["w2"], kp["w3t"], kp["w4t"],
              kp["b1"], kp["pp"], kp["cp"], kp["b3"])

    if variant == "resident":
        grid = (nb,)
        x_spec = pl.BlockSpec((block_b, P, C), lambda b: (b, 0, 0))
        param_specs = [pl.BlockSpec(a.shape, lambda b: (0, 0, 0)) for a in params]
        kernel = functools.partial(_resident_kernel, n_layers=L, block_b=block_b,
                                   patch=P, channel=C, hidden=H)
        dim_sem = ("parallel",)
    else:
        grid = (nb, L)
        x_spec = pl.BlockSpec((block_b, P, C), lambda b, l: (b, 0, 0))
        param_specs = [pl.BlockSpec((None,) + tuple(a.shape[1:]),
                                    lambda b, l: (l, 0, 0)) for a in params]
        kernel = functools.partial(_stream_kernel, block_b=block_b,
                                   patch=P, channel=C, hidden=H)
        dim_sem = ("parallel", "arbitrary")
        # NOTE(v5e): if weight DMAs show up exposed in a profile, add
        # pipeline_mode=pl.Buffered(3) on the four GEMM-weight specs and
        # shrink block_b to make VMEM room; sweep.

    out = pl.pallas_call(
        kernel,
        out_shape=jax.ShapeDtypeStruct((B, P, C), jnp.float32),
        grid_spec=pltpu.PrefetchScalarGridSpec(
            num_scalar_prefetch=0,
            grid=grid,
            in_specs=[x_spec] + param_specs,
            out_specs=x_spec,
        ),
        input_output_aliases={0: 0},      # x block is fully consumed at layer 0
        compiler_params=pltpu.CompilerParams(
            dimension_semantics=dim_sem,
            vmem_limit_bytes=vmem_limit),
    )(x, *params)
    return out if orig_dtype == jnp.float32 else out.astype(orig_dtype)


# --------------------------------------------------------------------------
# Parameter init (matches PyTorch: kaiming_normal_ weights, zero biases,
# LayerNorm gamma=1 / beta=0).
# --------------------------------------------------------------------------
def _kaiming_normal(key, out_dim, in_dim):
    std = math.sqrt(2.0 / in_dim)    # kaiming_normal_ default (fan_in, gain=sqrt(2))
    return jax.random.normal(key, (out_dim, in_dim), jnp.float32) * std


def init_mixer_params(key, patch, channel, hidden):
    k1, k2, k3, k4 = jax.random.split(key, 4)
    f32 = jnp.float32
    return dict(
        g1=jnp.ones((patch,), f32), be1=jnp.zeros((patch,), f32),
        w1=_kaiming_normal(k1, hidden, patch),   b1=jnp.zeros((hidden,), f32),
        w2=_kaiming_normal(k2, patch, hidden),   b2=jnp.zeros((patch,), f32),
        g2=jnp.ones((channel,), f32), be2=jnp.zeros((channel,), f32),
        w3=_kaiming_normal(k3, hidden, channel), b3=jnp.zeros((hidden,), f32),
        w4=_kaiming_normal(k4, channel, hidden), b4=jnp.zeros((channel,), f32),
    )


def init_stacked_mixer(key, patch, channel, hidden, layer):
    keys = jax.random.split(key, layer)
    return [init_mixer_params(k, patch, channel, hidden) for k in keys]


def pack_params(layers):
    """Stack per-layer params on a leading layer axis, pack the small LN/bias
    vectors into a few lane/sublane-oriented arrays, cast GEMM weights to bf16."""
    st = lambda name: jnp.stack([p[name] for p in layers], axis=0)
    bf16 = jnp.bfloat16
    return dict(
        w1=st("w1").astype(bf16),                         # (L, H, P)
        w2=st("w2").astype(bf16),                         # (L, P, H)
        w3t=jnp.swapaxes(st("w3"), 1, 2).astype(bf16),    # (L, C, H)
        w4t=jnp.swapaxes(st("w4"), 1, 2).astype(bf16),    # (L, H, C)
        b1=st("b1")[:, :, None],                          # (L, H, 1)
        b3=st("b3")[:, None, :],                          # (L, 1, H)
        pp=jnp.stack([st("g1"), st("be1"), st("b2")], axis=-1),  # (L, P, 3)
        cp=jnp.stack([st("g2"), st("be2"), st("b4")], axis=1),   # (L, 3, C)
    )


# --------------------------------------------------------------------------
# Pure-JAX f32 reference (mirrors the PyTorch forward exactly).
# --------------------------------------------------------------------------
def stacked_mixer_ref(x, layers):
    for p in layers:
        xt = jnp.swapaxes(x, -1, -2)                             # (B, C, P)
        mu = xt.mean(-1, keepdims=True)
        var = ((xt - mu) ** 2).mean(-1, keepdims=True)
        xn = (xt - mu) / jnp.sqrt(var + _EPS) * p["g1"] + p["be1"]
        h = jnp.maximum(xn @ p["w1"].T + p["b1"], 0.0)
        xt = h @ p["w2"].T + p["b2"] + xt
        x = jnp.swapaxes(xt, -1, -2)                             # (B, P, C)
        mu = x.mean(-1, keepdims=True)
        var = ((x - mu) ** 2).mean(-1, keepdims=True)
        xn = (x - mu) / jnp.sqrt(var + _EPS) * p["g2"] + p["be2"]
        h = jnp.maximum(xn @ p["w3"].T + p["b3"], 0.0)
        x = h @ p["w4"].T + p["b4"] + x
    return x


# --------------------------------------------------------------------------
if __name__ == "__main__":
    # Small, correctness-only shapes consistent with the module's forward
    # (input is (B, patch, channel)); see NOTE at top re: benchmarking shapes.
    B, PATCH, CHANNEL, HIDDEN, LAYERS = 2, 16, 8, 32, 2

    root = jax.random.PRNGKey(0)
    k_x, k_p = jax.random.split(root)

    x = jax.random.normal(k_x, (B, PATCH, CHANNEL), jnp.float32)
    raw_params = init_stacked_mixer(k_p, PATCH, CHANNEL, HIDDEN, LAYERS)
    kernel_params = pack_params(raw_params)

    ref = stacked_mixer_ref(x, raw_params)

    # Exercise both kernel variants plus the auto-selected one; compare against
    # the f32 reference (bf16 MXU matmuls -> loose tolerance).
    for variant in ("resident", "stream", None):
        out = jax.block_until_ready(
            stacked_mixer(x, kernel_params, force_variant=variant))
        assert out.shape == (B, PATCH, CHANNEL), out.shape
        assert out.dtype == jnp.float32
        assert bool(jnp.all(jnp.isfinite(out)))
        max_err = float(jnp.max(jnp.abs(out - ref)))
        assert max_err < 1e-1, f"variant={variant}: max abs err {max_err}"

    print("KERNEL_OK")
</pallas_src>

<mosaic_0001>
module attributes {stable_mosaic.version = 11 : i64} {
  func.func @_resident_kernel(%arg0: i32, %arg1: memref<1x16x8xf32, #tpu.memory_space<vmem>>, %arg2: memref<2x32x16xbf16, #tpu.memory_space<vmem>>, %arg3: memref<2x16x32xbf16, #tpu.memory_space<vmem>>, %arg4: memref<2x8x32xbf16, #tpu.memory_space<vmem>>, %arg5: memref<2x32x8xbf16, #tpu.memory_space<vmem>>, %arg6: memref<2x32x1xf32, #tpu.memory_space<vmem>>, %arg7: memref<2x16x3xf32, #tpu.memory_space<vmem>>, %arg8: memref<2x3x8xf32, #tpu.memory_space<vmem>>, %arg9: memref<2x1x32xf32, #tpu.memory_space<vmem>>, %arg10: memref<1x16x8xf32, #tpu.memory_space<vmem>>) attributes {dimension_semantics = [#tpu.dimension_semantics<parallel>], iteration_bounds = array<i64: 2>, scalar_prefetch = 0 : i64, scratch_operands = 0 : i64, tpu.core_type = #tpu.core_type<tc>, window_params = [{transform_indices = @transform_0, window_bounds = array<i64: 1, 16, 8>}, {pipeline_mode = #tpu.pipeline_mode<synchronous>, transform_indices = @transform_1, window_bounds = array<i64: 2, 32, 16>}, {pipeline_mode = #tpu.pipeline_mode<synchronous>, transform_indices = @transform_2, window_bounds = array<i64: 2, 16, 32>}, {pipeline_mode = #tpu.pipeline_mode<synchronous>, transform_indices = @transform_3, window_bounds = array<i64: 2, 8, 32>}, {pipeline_mode = #tpu.pipeline_mode<synchronous>, transform_indices = @transform_4, window_bounds = array<i64: 2, 32, 8>}, {pipeline_mode = #tpu.pipeline_mode<synchronous>, transform_indices = @transform_5, window_bounds = array<i64: 2, 32, 1>}, {pipeline_mode = #tpu.pipeline_mode<synchronous>, transform_indices = @transform_6, window_bounds = array<i64: 2, 16, 3>}, {pipeline_mode = #tpu.pipeline_mode<synchronous>, transform_indices = @transform_7, window_bounds = array<i64: 2, 3, 8>}, {pipeline_mode = #tpu.pipeline_mode<synchronous>, transform_indices = @transform_8, window_bounds = array<i64: 2, 1, 32>}, {transform_indices = @transform_9, window_bounds = array<i64: 1, 16, 8>}]} {
    %c0 = arith.constant 0 : index
    %c0_0 = arith.constant 0 : index
    %c0_1 = arith.constant 0 : index
    %0 = vector.load %arg1[%c0, %c0_0, %c0_1] : memref<1x16x8xf32, #tpu.memory_space<vmem>>, vector<1x16x8xf32>
    %c0_i32 = arith.constant 0 : i32
    %c2_i32 = arith.constant 2 : i32
    %1 = arith.addi %c0_i32, %c2_i32 : i32
    %c1_i32 = arith.constant 1 : i32
    %2 = scf.for %arg11 = %c0_i32 to %1 step %c1_i32 iter_args(%arg12 = %0) -> (vector<1x16x8xf32>)  : i32 {
      %4 = arith.index_cast %arg11 : i32 to index
      %c0_6 = arith.constant 0 : index
      %c0_7 = arith.constant 0 : index
      %5 = vector.load %arg2[%4, %c0_6, %c0_7] : memref<2x32x16xbf16, #tpu.memory_space<vmem>>, vector<1x32x16xbf16>
      %6 = vector.shape_cast %5 : vector<1x32x16xbf16> to vector<32x16xbf16>
      %7 = arith.index_cast %arg11 : i32 to index
      %c0_8 = arith.constant 0 : index
      %c0_9 = arith.constant 0 : index
      %8 = vector.load %arg3[%7, %c0_8, %c0_9] : memref<2x16x32xbf16, #tpu.memory_space<vmem>>, vector<1x16x32xbf16>
      %9 = vector.shape_cast %8 : vector<1x16x32xbf16> to vector<16x32xbf16>
      %10 = arith.index_cast %arg11 : i32 to index
      %c0_10 = arith.constant 0 : index
      %c0_11 = arith.constant 0 : index
      %11 = vector.load %arg4[%10, %c0_10, %c0_11] : memref<2x8x32xbf16, #tpu.memory_space<vmem>>, vector<1x8x32xbf16>
      %12 = vector.shape_cast %11 : vector<1x8x32xbf16> to vector<8x32xbf16>
      %13 = arith.index_cast %arg11 : i32 to index
      %c0_12 = arith.constant 0 : index
      %c0_13 = arith.constant 0 : index
      %14 = vector.load %arg5[%13, %c0_12, %c0_13] : memref<2x32x8xbf16, #tpu.memory_space<vmem>>, vector<1x32x8xbf16>
      %15 = vector.shape_cast %14 : vector<1x32x8xbf16> to vector<32x8xbf16>
      %16 = arith.index_cast %arg11 : i32 to index
      %c0_14 = arith.constant 0 : index
      %c0_15 = arith.constant 0 : index
      %17 = vector.load %arg6[%16, %c0_14, %c0_15] : memref<2x32x1xf32, #tpu.memory_space<vmem>>, vector<1x32x1xf32>
      %18 = vector.shape_cast %17 : vector<1x32x1xf32> to vector<32x1xf32>
      %19 = arith.index_cast %arg11 : i32 to index
      %c0_16 = arith.constant 0 : index
      %c0_17 = arith.constant 0 : index
      %20 = vector.load %arg7[%19, %c0_16, %c0_17] : memref<2x16x3xf32, #tpu.memory_space<vmem>>, vector<1x16x3xf32>
      %21 = vector.shape_cast %20 : vector<1x16x3xf32> to vector<16x3xf32>
      %22 = arith.index_cast %arg11 : i32 to index
      %c0_18 = arith.constant 0 : index
      %c0_19 = arith.constant 0 : index
      %23 = vector.load %arg8[%22, %c0_18, %c0_19] : memref<2x3x8xf32, #tpu.memory_space<vmem>>, vector<1x3x8xf32>
      %24 = vector.shape_cast %23 : vector<1x3x8xf32> to vector<3x8xf32>
      %25 = arith.index_cast %arg11 : i32 to index
      %c0_20 = arith.constant 0 : index
      %c0_21 = arith.constant 0 : index
      %26 = vector.load %arg9[%25, %c0_20, %c0_21] : memref<2x1x32xf32, #tpu.memory_space<vmem>>, vector<1x1x32xf32>
      %27 = vector.shape_cast %26 : vector<1x1x32xf32> to vector<1x32xf32>
      %28 = vector.extract_strided_slice %21 {offsets = [0, 0], sizes = [16, 1], strides = [1, 1]} : vector<16x3xf32> to vector<16x1xf32>
      %29 = vector.extract_strided_slice %21 {offsets = [0, 1], sizes = [16, 1], strides = [1, 1]} : vector<16x3xf32> to vector<16x1xf32>
      %30 = vector.extract_strided_slice %21 {offsets = [0, 2], sizes = [16, 1], strides = [1, 1]} : vector<16x3xf32> to vector<16x1xf32>
      %31 = vector.extract_strided_slice %24 {offsets = [0, 0], sizes = [1, 8], strides = [1, 1]} : vector<3x8xf32> to vector<1x8xf32>
      %32 = vector.extract_strided_slice %24 {offsets = [1, 0], sizes = [1, 8], strides = [1, 1]} : vector<3x8xf32> to vector<1x8xf32>
      %33 = vector.extract_strided_slice %24 {offsets = [2, 0], sizes = [1, 8], strides = [1, 1]} : vector<3x8xf32> to vector<1x8xf32>
      %cst = arith.constant dense<0.000000e+00> : vector<1x8xf32>
      %34 = vector.multi_reduction <add>, %arg12, %cst [1] : vector<1x16x8xf32> to vector<1x8xf32>
      %35 = vector.shape_cast %34 : vector<1x8xf32> to vector<1x1x8xf32>
      %36 = arith.mulf %arg12, %arg12 : vector<1x16x8xf32>
      %cst_22 = arith.constant dense<0.000000e+00> : vector<1x8xf32>
      %37 = vector.multi_reduction <add>, %36, %cst_22 [1] : vector<1x16x8xf32> to vector<1x8xf32>
      %38 = vector.shape_cast %37 : vector<1x8xf32> to vector<1x1x8xf32>
      %cst_23 = arith.constant 6.250000e-02 : f32
      %39 = vector.broadcast %cst_23 : f32 to vector<1x1x8xf32>
      %40 = arith.mulf %35, %39 : vector<1x1x8xf32>
      %cst_24 = arith.constant 6.250000e-02 : f32
      %41 = vector.broadcast %cst_24 : f32 to vector<1x1x8xf32>
      %42 = arith.mulf %38, %41 : vector<1x1x8xf32>
      %43 = arith.mulf %40, %40 : vector<1x1x8xf32>
      %44 = arith.subf %42, %43 : vector<1x1x8xf32>
      %cst_25 = arith.constant 0.000000e+00 : f32
      %45 = vector.broadcast %cst_25 : f32 to vector<1x1x8xf32>
      %46 = arith.maximumf %44, %45 : vector<1x1x8xf32>
      %47 = vector.broadcast %40 : vector<1x1x8xf32> to vector<1x16x8xf32>
      %48 = arith.subf %arg12, %47 : vector<1x16x8xf32>
      %cst_26 = arith.constant 9.99999974E-6 : f32
      %49 = vector.broadcast %cst_26 : f32 to vector<1x1x8xf32>
      %50 = arith.addf %46, %49 : vector<1x1x8xf32>
      %51 = math.rsqrt %50 : vector<1x1x8xf32>
      %52 = vector.broadcast %51 : vector<1x1x8xf32> to vector<1x16x8xf32>
      %53 = arith.mulf %48, %52 : vector<1x16x8xf32>
      %54 = vector.shape_cast %28 : vector<16x1xf32> to vector<1x16x1xf32>
      %55 = vector.broadcast %54 : vector<1x16x1xf32> to vector<1x16x8xf32>
      %56 = arith.mulf %53, %55 : vector<1x16x8xf32>
      %57 = vector.shape_cast %29 : vector<16x1xf32> to vector<1x16x1xf32>
      %58 = vector.broadcast %57 : vector<1x16x1xf32> to vector<1x16x8xf32>
      %59 = arith.addf %56, %58 : vector<1x16x8xf32>
      %60 = arith.truncf %59 : vector<1x16x8xf32> to vector<1x16x8xbf16>
      %61 = vector.shape_cast %6 : vector<32x16xbf16> to vector<1x32x16xbf16>
      "tpu.trace_start"() <{level = 10 : i32, message = "bhp,bpc->bhc"}> : () -> ()
      %cst_27 = arith.constant dense<0.000000e+00> : vector<1x32x8xf32>
      %62 = tpu.matmul %61, %60, %cst_27 {dimension_numbers = #tpu.dot_dimension_numbers<[2], [1], [1], [2], [0, 0, 0, 1, 1, 2], [0], [0]>} : vector<1x32x16xbf16>, vector<1x16x8xbf16>, vector<1x32x8xf32> -> vector<1x32x8xf32>
      "tpu.trace_stop"() : () -> ()
      %63 = vector.shape_cast %18 : vector<32x1xf32> to vector<1x32x1xf32>
      %64 = vector.broadcast %63 : vector<1x32x1xf32> to vector<1x32x8xf32>
      %65 = arith.addf %62, %64 : vector<1x32x8xf32>
      %cst_28 = arith.constant 0.000000e+00 : f32
      %66 = vector.broadcast %cst_28 : f32 to vector<1x32x8xf32>
      %67 = arith.maximumf %65, %66 : vector<1x32x8xf32>
      %68 = arith.truncf %67 : vector<1x32x8xf32> to vector<1x32x8xbf16>
      %69 = vector.shape_cast %9 : vector<16x32xbf16> to vector<1x16x32xbf16>
      "tpu.trace_start"() <{level = 10 : i32, message = "bph,bhc->bpc"}> : () -> ()
      %cst_29 = arith.constant dense<0.000000e+00> : vector<1x16x8xf32>
      %70 = tpu.matmul %69, %68, %cst_29 {dimension_numbers = #tpu.dot_dimension_numbers<[2], [1], [1], [2], [0, 0, 0, 1, 1, 2], [0], [0]>} : vector<1x16x32xbf16>, vector<1x32x8xbf16>, vector<1x16x8xf32> -> vector<1x16x8xf32>
      "tpu.trace_stop"() : () -> ()
      %71 = vector.shape_cast %30 : vector<16x1xf32> to vector<1x16x1xf32>
      %72 = vector.broadcast %71 : vector<1x16x1xf32> to vector<1x16x8xf32>
      %73 = arith.addf %70, %72 : vector<1x16x8xf32>
      %74 = arith.addf %73, %arg12 : vector<1x16x8xf32>
      %75 = vector.shape_cast %74 : vector<1x16x8xf32> to vector<16x8xf32>
      %cst_30 = arith.constant dense<0.000000e+00> : vector<16xf32>
      %76 = vector.multi_reduction <add>, %75, %cst_30 [1] : vector<16x8xf32> to vector<16xf32>
      %77 = vector.shape_cast %76 : vector<16xf32> to vector<16x1xf32>
      %78 = arith.mulf %75, %75 : vector<16x8xf32>
      %cst_31 = arith.constant dense<0.000000e+00> : vector<16xf32>
      %79 = vector.multi_reduction <add>, %78, %cst_31 [1] : vector<16x8xf32> to vector<16xf32>
      %80 = vector.shape_cast %79 : vector<16xf32> to vector<16x1xf32>
      %cst_32 = arith.constant 1.250000e-01 : f32
      %81 = vector.broadcast %cst_32 : f32 to vector<16x1xf32>
      %82 = arith.mulf %77, %81 : vector<16x1xf32>
      %cst_33 = arith.constant 1.250000e-01 : f32
      %83 = vector.broadcast %cst_33 : f32 to vector<16x1xf32>
      %84 = arith.mulf %80, %83 : vector<16x1xf32>
      %85 = arith.mulf %82, %82 : vector<16x1xf32>
      %86 = arith.subf %84, %85 : vector<16x1xf32>
      %cst_34 = arith.constant 0.000000e+00 : f32
      %87 = vector.broadcast %cst_34 : f32 to vector<16x1xf32>
      %88 = arith.maximumf %86, %87 : vector<16x1xf32>
      %89 = vector.broadcast %82 : vector<16x1xf32> to vector<16x8xf32>
      %90 = arith.subf %75, %89 : vector<16x8xf32>
      %cst_35 = arith.constant 9.99999974E-6 : f32
      %91 = vector.broadcast %cst_35 : f32 to vector<16x1xf32>
      %92 = arith.addf %88, %91 : vector<16x1xf32>
      %93 = math.rsqrt %92 : vector<16x1xf32>
      %94 = vector.broadcast %93 : vector<16x1xf32> to vector<16x8xf32>
      %95 = arith.mulf %90, %94 : vector<16x8xf32>
      %96 = vector.broadcast %31 : vector<1x8xf32> to vector<16x8xf32>
      %97 = arith.mulf %95, %96 : vector<16x8xf32>
      %98 = vector.broadcast %32 : vector<1x8xf32> to vector<16x8xf32>
      %99 = arith.addf %97, %98 : vector<16x8xf32>
      %100 = arith.truncf %99 : vector<16x8xf32> to vector<16x8xbf16>
      %cst_36 = arith.constant dense<0.000000e+00> : vector<16x32xf32>
      %101 = tpu.matmul %100, %12, %cst_36 {dimension_numbers = #tpu.dot_dimension_numbers<[1], [0], [0], [1], [0, 0, 1, 1], [], []>} : vector<16x8xbf16>, vector<8x32xbf16>, vector<16x32xf32> -> vector<16x32xf32>
      %102 = vector.broadcast %27 : vector<1x32xf32> to vector<16x32xf32>
      %103 = arith.addf %101, %102 : vector<16x32xf32>
      %cst_37 = arith.constant 0.000000e+00 : f32
      %104 = vector.broadcast %cst_37 : f32 to vector<16x32xf32>
      %105 = arith.maximumf %103, %104 : vector<16x32xf32>
      %106 = arith.truncf %105 : vector<16x32xf32> to vector<16x32xbf16>
      %cst_38 = arith.constant dense<0.000000e+00> : vector<16x8xf32>
      %107 = tpu.matmul %106, %15, %cst_38 {dimension_numbers = #tpu.dot_dimension_numbers<[1], [0], [0], [1], [0, 0, 1, 1], [], []>} : vector<16x32xbf16>, vector<32x8xbf16>, vector<16x8xf32> -> vector<16x8xf32>
      %108 = vector.broadcast %33 : vector<1x8xf32> to vector<16x8xf32>
      %109 = arith.addf %107, %108 : vector<16x8xf32>
      %110 = arith.addf %109, %75 : vector<16x8xf32>
      %111 = vector.shape_cast %110 : vector<16x8xf32> to vector<1x16x8xf32>
      scf.yield %111 : vector<1x16x8xf32>
    }
    %c2_i32_2 = arith.constant 2 : i32
    %c0_3 = arith.constant 0 : index
    %c0_4 = arith.constant 0 : index
    %c0_5 = arith.constant 0 : index
    %3 = vector.load %arg10[%c0_3, %c0_4, %c0_5] : memref<1x16x8xf32, #tpu.memory_space<vmem>>, vector<1x16x8xf32>
    tpu.vector_store %arg10[%c0_3, %c0_4, %c0_5], %2 {strides = array<i32>} : memref<1x16x8xf32, #tpu.memory_space<vmem>>, vector<1x16x8xf32>,
    return
  }
  func.func @transform_0(%arg0: i32) -> (i32, i32, i32) {
    %c0_i32 = arith.constant 0 : i32
    %c0_i32_0 = arith.constant 0 : i32
    %c0_i32_1 = arith.constant 0 : i32
    return %arg0, %c0_i32, %c0_i32_0 : i32, i32, i32
  }
  func.func @transform_1(%arg0: i32) -> (i32, i32, i32) {
    %c0_i32 = arith.constant 0 : i32
    %c0_i32_0 = arith.constant 0 : i32
    %c0_i32_1 = arith.constant 0 : i32
    %c0_i32_2 = arith.constant 0 : i32
    return %c0_i32, %c0_i32_0, %c0_i32_1 : i32, i32, i32
  }
  func.func @transform_2(%arg0: i32) -> (i32, i32, i32) {
    %c0_i32 = arith.constant 0 : i32
    %c0_i32_0 = arith.constant 0 : i32
    %c0_i32_1 = arith.constant 0 : i32
    %c0_i32_2 = arith.constant 0 : i32
    return %c0_i32, %c0_i32_0, %c0_i32_1 : i32, i32, i32
  }
  func.func @transform_3(%arg0: i32) -> (i32, i32, i32) {
    %c0_i32 = arith.constant 0 : i32
    %c0_i32_0 = arith.constant 0 : i32
    %c0_i32_1 = arith.constant 0 : i32
    %c0_i32_2 = arith.constant 0 : i32
    return %c0_i32, %c0_i32_0, %c0_i32_1 : i32, i32, i32
  }
  func.func @transform_4(%arg0: i32) -> (i32, i32, i32) {
    %c0_i32 = arith.constant 0 : i32
    %c0_i32_0 = arith.constant 0 : i32
    %c0_i32_1 = arith.constant 0 : i32
    %c0_i32_2 = arith.constant 0 : i32
    return %c0_i32, %c0_i32_0, %c0_i32_1 : i32, i32, i32
  }
  func.func @transform_5(%arg0: i32) -> (i32, i32, i32) {
    %c0_i32 = arith.constant 0 : i32
    %c0_i32_0 = arith.constant 0 : i32
    %c0_i32_1 = arith.constant 0 : i32
    %c0_i32_2 = arith.constant 0 : i32
    return %c0_i32, %c0_i32_0, %c0_i32_1 : i32, i32, i32
  }
  func.func @transform_6(%arg0: i32) -> (i32, i32, i32) {
    %c0_i32 = arith.constant 0 : i32
    %c0_i32_0 = arith.constant 0 : i32
    %c0_i32_1 = arith.constant 0 : i32
    %c0_i32_2 = arith.constant 0 : i32
    return %c0_i32, %c0_i32_0, %c0_i32_1 : i32, i32, i32
  }
  func.func @transform_7(%arg0: i32) -> (i32, i32, i32) {
    %c0_i32 = arith.constant 0 : i32
    %c0_i32_0 = arith.constant 0 : i32
    %c0_i32_1 = arith.constant 0 : i32
    %c0_i32_2 = arith.constant 0 : i32
    return %c0_i32, %c0_i32_0, %c0_i32_1 : i32, i32, i32
  }
  func.func @transform_8(%arg0: i32) -> (i32, i32, i32) {
    %c0_i32 = arith.constant 0 : i32
    %c0_i32_0 = arith.constant 0 : i32
    %c0_i32_1 = arith.constant 0 : i32
    %c0_i32_2 = arith.constant 0 : i32
    return %c0_i32, %c0_i32_0, %c0_i32_1 : i32, i32, i32
  }
  func.func @transform_9(%arg0: i32) -> (i32, i32, i32) {
    %c0_i32 = arith.constant 0 : i32
    %c0_i32_0 = arith.constant 0 : i32
    %c0_i32_1 = arith.constant 0 : i32
    return %arg0, %c0_i32, %c0_i32_0 : i32, i32, i32
  }
}

</mosaic_0001>

<llo_original>
// kernel: tpu_custom_call.1
$region0: #{tpu_custom_call.1}
  #allocation0 [shape = 'u32[]', space=smem, size = 0x4, offset = 0x4, fixed_abs, tag = 'smem constant byte address 0x4 - core index']
  #allocation1 [shape = 'u32[144,128]{1,0:T(1,128)}', space=vmem, size = 0x12000, scoped, tag = 'internal scratch']
  %s0 = inlined_call_operand.vmem [shape: f32[2,16,8], index: 0, kind: input, shape index: {}, may-alias: {0,9}]
  %s1 = inlined_call_operand.vmem [shape: bf16[2,32,16], index: 1, kind: input, shape index: {}]
  %s2 = inlined_call_operand.vmem [shape: bf16[2,16,32], index: 2, kind: input, shape index: {}]
  %s3 = inlined_call_operand.vmem [shape: bf16[2,8,32], index: 3, kind: input, shape index: {}]
  %s4 = inlined_call_operand.vmem [shape: bf16[2,32,8], index: 4, kind: input, shape index: {}]
  %s5 = inlined_call_operand.vmem [shape: f32[2,32,1], index: 5, kind: input, shape index: {}]
  %s6 = inlined_call_operand.vmem [shape: f32[2,16,3], index: 6, kind: input, shape index: {}]
  %s7 = inlined_call_operand.vmem [shape: f32[2,3,8], index: 7, kind: input, shape index: {}]
  %s8 = inlined_call_operand.vmem [shape: f32[2,1,32], index: 8, kind: input, shape index: {}]
  %s9 = inlined_call_operand.vmem [shape: f32[2,16,8], index: 9, kind: output, shape index: {}, may-alias: {0,9}]
  %s10 = sld [smem:[#allocation0]]
  $region76: #{tpu_custom_call.1} parent=0
    _
  %s12 = ssub.s32 1, %s10
  %s13 = scalar_select 0, %s12, %s10
  loop: start=0, step=1, limit=4
  $region2: #{tpu_custom_call.1} parent=0 // loop_pre_header
    _
  $region3: #{tpu_custom_call.1} parent=0 // loop_header
    %s15 = sphi 0, %s19
    %p16 = scmp.ge.s32.totalorder %s15, 4
    %s25 = sphi 0, %s27
    %s28 = sphi 0, %s25
    %s29 = sphi 0, %s28
    %s45 = sphi 0, %s29
    %s49 = sphi 0, %s49
    %s51 = sphi 0, %s49
    %s52 = sphi 0, %s51
    %s66 = sphi 0, %s52
    %s70 = sphi 0, %s70
    %s72 = sphi 0, %s70
    %s73 = sphi 0, %s72
    %s87 = sphi 0, %s73
    %s91 = sphi 0, %s91
    %s93 = sphi 0, %s91
    %s94 = sphi 0, %s93
    %s108 = sphi 0, %s94
    %s112 = sphi 0, %s112
    %s114 = sphi 0, %s112
    %s115 = sphi 0, %s114
    %s129 = sphi 0, %s115
    %s133 = sphi 0, %s133
    %s135 = sphi 0, %s133
    %s136 = sphi 0, %s135
    %s150 = sphi 0, %s136
    %s154 = sphi 0, %s154
    %s156 = sphi 0, %s154
    %s157 = sphi 0, %s156
    %s171 = sphi 0, %s157
    %s175 = sphi 0, %s175
    %s177 = sphi 0, %s175
    %s178 = sphi 0, %s177
    %s192 = sphi 0, %s178
    %s196 = sphi 0, %s196
    %s198 = sphi 0, %s196
    %s199 = sphi 0, %s198
    %s213 = sphi 0, %s199
    %s219 = sphi 0, %s221
    %s222 = sphi 0, %s219
    %s223 = sphi 0, %s222
    %s239 = sphi 0, %s223
  $region4: #{tpu_custom_call.1} parent=0 // loop_header_branch
    %18 = sbr.rel (%p16) target = $region8
  $region5: #{tpu_custom_call.1} parent=0 // loop_body
    %s20 = ssub.s32 %s15, 1
    %s21 = ssub.s32 %s15, 2
    %s22 = sadd.s32 %s15, 1
    %s23 = ssub.s32 %s15, %s22
    %p24 = scmp.eq.s32.totalorder %s23, 0
    %s26 = sadd.s32 %s25, 1
    %s27 = scalar_select %p24, %s25, %s26
    %p30 = pneg %p24
    %p31 = scmp.eq.s32.totalorder %s15, 1
    %p32 = por %p30, %p31
    %p33 = scmp.ne.s32.totalorder %s25, %s28
    %p34 = scmp.eq.s32.totalorder %s15, 0
    %p35 = por %p33, %p34
    %p36 = scmp.ne.s32.totalorder %s25, %s28
    %p37 = scmp.eq.s32.totalorder %s20, 1
    %p38 = por %p36, %p37
    %p39 = scmp.ne.s32.totalorder %s28, %s29
    %p40 = scmp.eq.s32.totalorder %s20, 0
    %p41 = por %p39, %p40
    %p42 = scmp.ne.s32.totalorder %s28, %s29
    %p43 = scmp.eq.s32.totalorder %s21, 1
    %p44 = por %p42, %p43
    %p46 = scmp.ne.s32.totalorder %s29, %s45
    %p47 = scmp.eq.s32.totalorder %s21, 0
    %p48 = por %p46, %p47
    %s50 = sadd.s32 %s49, 1
    %p53 = scmp.eq.s32.totalorder %s15, 1
    %p54 = scmp.ne.s32.totalorder %s49, %s51
    %p55 = scmp.eq.s32.totalorder %s15, 0
    %p56 = por %p54, %p55
    %p57 = scmp.ne.s32.totalorder %s49, %s51
    %p58 = scmp.eq.s32.totalorder %s20, 1
    %p59 = por %p57, %p58
    %p60 = scmp.ne.s32.totalorder %s51, %s52
    %p61 = scmp.eq.s32.totalorder %s20, 0
    %p62 = por %p60, %p61
    %p63 = scmp.ne.s32.totalorder %s51, %s52
    %p64 = scmp.eq.s32.totalorder %s21, 1
    %p65 = por %p63, %p64
    %p67 = scmp.ne.s32.totalorder %s52, %s66
    %p68 = scmp.eq.s32.totalorder %s21, 0
    %p69 = por %p67, %p68
    %s71 = sadd.s32 %s70, 1
    %p74 = scmp.eq.s32.totalorder %s15, 1
    %p75 = scmp.ne.s32.totalorder %s70, %s72
    %p76 = scmp.eq.s32.totalorder %s15, 0
    %p77 = por %p75, %p76
    %p78 = scmp.ne.s32.totalorder %s70, %s72
    %p79 = scmp.eq.s32.totalorder %s20, 1
    %p80 = por %p78, %p79
    %p81 = scmp.ne.s32.totalorder %s72, %s73
    %p82 = scmp.eq.s32.totalorder %s20, 0
    %p83 = por %p81, %p82
    %p84 = scmp.ne.s32.totalorder %s72, %s73
    %p85 = scmp.eq.s32.totalorder %s21, 1
    %p86 = por %p84, %p85
    %p88 = scmp.ne.s32.totalorder %s73, %s87
    %p89 = scmp.eq.s32.totalorder %s21, 0
    %p90 = por %p88, %p89
    %s92 = sadd.s32 %s91, 1
    %p95 = scmp.eq.s32.totalorder %s15, 1
    %p96 = scmp.ne.s32.totalorder %s91, %s93
    %p97 = scmp.eq.s32.totalorder %s15, 0
    %p98 = por %p96, %p97
    %p99 = scmp.ne.s32.totalorder %s91, %s93
    %p100 = scmp.eq.s32.totalorder %s20, 1
    %p101 = por %p99, %p100
    %p102 = scmp.ne.s32.totalorder %s93, %s94
    %p103 = scmp.eq.s32.totalorder %s20, 0
    %p104 = por %p102, %p103
    %p105 = scmp.ne.s32.totalorder %s93, %s94
    %p106 = scmp.eq.s32.totalorder %s21, 1
    %p107 = por %p105, %p106
    %p109 = scmp.ne.s32.totalorder %s94, %s108
    %p110 = scmp.eq.s32.totalorder %s21, 0
    %p111 = por %p109, %p110
    %s113 = sadd.s32 %s112, 1
    %p116 = scmp.eq.s32.totalorder %s15, 1
    %p117 = scmp.ne.s32.totalorder %s112, %s114
    %p118 = scmp.eq.s32.totalorder %s15, 0
    %p119 = por %p117, %p118
    %p120 = scmp.ne.s32.totalorder %s112, %s114
    %p121 = scmp.eq.s32.totalorder %s20, 1
    %p122 = por %p120, %p121
    %p123 = scmp.ne.s32.totalorder %s114, %s115
    %p124 = scmp.eq.s32.totalorder %s20, 0
    %p125 = por %p123, %p124
    %p126 = scmp.ne.s32.totalorder %s114, %s115
    %p127 = scmp.eq.s32.totalorder %s21, 1
    %p128 = por %p126, %p127
    %p130 = scmp.ne.s32.totalorder %s115, %s129
    %p131 = scmp.eq.s32.totalorder %s21, 0
    %p132 = por %p130, %p131
    %s134 = sadd.s32 %s133, 1
    %p137 = scmp.eq.s32.totalorder %s15, 1
    %p138 = scmp.ne.s32.totalorder %s133, %s135
    %p139 = scmp.eq.s32.totalorder %s15, 0
    %p140 = por %p138, %p139
    %p141 = scmp.ne.s32.totalorder %s133, %s135
    %p142 = scmp.eq.s32.totalorder %s20, 1
    %p143 = por %p141, %p142
    %p144 = scmp.ne.s32.totalorder %s135, %s136
    %p145 = scmp.eq.s32.totalorder %s20, 0
    %p146 = por %p144, %p145
    %p147 = scmp.ne.s32.totalorder %s135, %s136
    %p148 = scmp.eq.s32.totalorder %s21, 1
    %p149 = por %p147, %p148
    %p151 = scmp.ne.s32.totalorder %s136, %s150
    %p152 = scmp.eq.s32.totalorder %s21, 0
    %p153 = por %p151, %p152
    %s155 = sadd.s32 %s154, 1
    %p158 = scmp.eq.s32.totalorder %s15, 1
    %p159 = scmp.ne.s32.totalorder %s154, %s156
    %p160 = scmp.eq.s32.totalorder %s15, 0
    %p161 = por %p159, %p160
    %p162 = scmp.ne.s32.totalorder %s154, %s156
    %p163 = scmp.eq.s32.totalorder %s20, 1
    %p164 = por %p162, %p163
    %p165 = scmp.ne.s32.totalorder %s156, %s157
    %p166 = scmp.eq.s32.totalorder %s20, 0
    %p167 = por %p165, %p166
    %p168 = scmp.ne.s32.totalorder %s156, %s157
    %p169 = scmp.eq.s32.totalorder %s21, 1
    %p170 = por %p168, %p169
    %p172 = scmp.ne.s32.totalorder %s157, %s171
    %p173 = scmp.eq.s32.totalorder %s21, 0
    %p174 = por %p172, %p173
    %s176 = sadd.s32 %s175, 1
    %p179 = scmp.eq.s32.totalorder %s15, 1
    %p180 = scmp.ne.s32.totalorder %s175, %s177
    %p181 = scmp.eq.s32.totalorder %s15, 0
    %p182 = por %p180, %p181
    %p183 = scmp.ne.s32.totalorder %s175, %s177
    %p184 = scmp.eq.s32.totalorder %s20, 1
    %p185 = por %p183, %p184
    %p186 = scmp.ne.s32.totalorder %s177, %s178
    %p187 = scmp.eq.s32.totalorder %s20, 0
    %p188 = por %p186, %p187
    %p189 = scmp.ne.s32.totalorder %s177, %s178
    %p190 = scmp.eq.s32.totalorder %s21, 1
    %p191 = por %p189, %p190
    %p193 = scmp.ne.s32.totalorder %s178, %s192
    %p194 = scmp.eq.s32.totalorder %s21, 0
    %p195 = por %p193, %p194
    %s197 = sadd.s32 %s196, 1
    %p200 = scmp.eq.s32.totalorder %s15, 1
    %p201 = scmp.ne.s32.totalorder %s196, %s198
    %p202 = scmp.eq.s32.totalorder %s15, 0
    %p203 = por %p201, %p202
    %p204 = scmp.ne.s32.totalorder %s196, %s198
    %p205 = scmp.eq.s32.totalorder %s20, 1
    %p206 = por %p204, %p205
    %p207 = scmp.ne.s32.totalorder %s198, %s199
    %p208 = scmp.eq.s32.totalorder %s20, 0
    %p209 = por %p207, %p208
    %p210 = scmp.ne.s32.totalorder %s198, %s199
    %p211 = scmp.eq.s32.totalorder %s21, 1
    %p212 = por %p210, %p211
    %p214 = scmp.ne.s32.totalorder %s199, %s213
    %p215 = scmp.eq.s32.totalorder %s21, 0
    %p216 = por %p214, %p215
    %s217 = ssub.s32 %s15, %s22
    %p218 = scmp.eq.s32.totalorder %s217, 0
    %s220 = sadd.s32 %s219, 1
    %s221 = scalar_select %p218, %s219, %s220
    %p224 = pneg %p218
    %p225 = scmp.eq.s32.totalorder %s15, 1
    %p226 = por %p224, %p225
    %p227 = scmp.ne.s32.totalorder %s219, %s222
    %p228 = scmp.eq.s32.totalorder %s15, 0
    %p229 = por %p227, %p228
    %p230 = scmp.ne.s32.totalorder %s219, %s222
    %p231 = scmp.eq.s32.totalorder %s20, 1
    %p232 = por %p230, %p231
    %p233 = scmp.ne.s32.totalorder %s222, %s223
    %p234 = scmp.eq.s32.totalorder %s20, 0
    %p235 = por %p233, %p234
    %p236 = scmp.ne.s32.totalorder %s222, %s223
    %p237 = scmp.eq.s32.totalorder %s21, 1
    %p238 = por %p236, %p237
    %p240 = scmp.ne.s32.totalorder %s223, %s239
    %p241 = scmp.eq.s32.totalorder %s21, 0
    %p242 = por %p240, %p241
    %p243 = scmp.le.s32.totalorder 1, %s15
    %p244 = scmp.lt.s32.totalorder %s15, 3
    %p245 = pnand %p243, %p244
    %p246 = pneg %p245
    // Predicated region
    $region9: #{tpu_custom_call.1} parent=5 // pred_check
      _
    $region10: #{tpu_custom_call.1} parent=5 // pred_check_branch
      %248 = sbr.rel (%p245) target = $region12
    $region11: #{tpu_custom_call.1} parent=5 // pred_region
      %s249 = ssub.s32 %s15, 1
      // Predicated region
      $region13: #{tpu_custom_call.1} parent=11 // pred_check
        %p250 = pneg %p62
      $region14: #{tpu_custom_call.1} parent=11 // pred_check_branch
        %252 = sbr.rel (%p250) target = $region16
      $region15: #{tpu_custom_call.1} parent=11 // pred_region
        _
      $region16: #{tpu_custom_call.1} parent=11 // pred_fallthru
        _
      // Predicated region
      $region17: #{tpu_custom_call.1} parent=11 // pred_check
        %p253 = pneg %p83
      $region18: #{tpu_custom_call.1} parent=11 // pred_check_branch
        %255 = sbr.rel (%p253) target = $region20
      $region19: #{tpu_custom_call.1} parent=11 // pred_region
        _
      $region20: #{tpu_custom_call.1} parent=11 // pred_fallthru
        _
      // Predicated region
      $region21: #{tpu_custom_call.1} parent=11 // pred_check
        %p256 = pneg %p104
      $region22: #{tpu_custom_call.1} parent=11 // pred_check_branch
        %258 = sbr.rel (%p256) target = $region24
      $region23: #{tpu_custom_call.1} parent=11 // pred_region
        _
      $region24: #{tpu_custom_call.1} parent=11 // pred_fallthru
        _
      // Predicated region
      $region25: #{tpu_custom_call.1} parent=11 // pred_check
        %p259 = pneg %p125
      $region26: #{tpu_custom_call.1} parent=11 // pred_check_branch
        %261 = sbr.rel (%p259) target = $region28
      $region27: #{tpu_custom_call.1} parent=11 // pred_region
        _
      $region28: #{tpu_custom_call.1} parent=11 // pred_fallthru
        _
      // Predicated region
      $region29: #{tpu_custom_call.1} parent=11 // pred_check
        %p262 = pneg %p146
      $region30: #{tpu_custom_call.1} parent=11 // pred_check_branch
        %264 = sbr.rel (%p262) target = $region32
      $region31: #{tpu_custom_call.1} parent=11 // pred_region
        _
      $region32: #{tpu_custom_call.1} parent=11 // pred_fallthru
        _
      // Predicated region
      $region33: #{tpu_custom_call.1} parent=11 // pred_check
        %p265 = pneg %p167
      $region34: #{tpu_custom_call.1} parent=11 // pred_check_branch
        %267 = sbr.rel (%p265) target = $region36
      $region35: #{tpu_custom_call.1} parent=11 // pred_region
        _
      $region36: #{tpu_custom_call.1} parent=11 // pred_fallthru
        _
      // Predicated region
      $region37: #{tpu_custom_call.1} parent=11 // pred_check
        %p268 = pneg %p188
      $region38: #{tpu_custom_call.1} parent=11 // pred_check_branch
        %270 = sbr.rel (%p268) target = $region40
      $region39: #{tpu_custom_call.1} parent=11 // pred_region
        _
      $region40: #{tpu_custom_call.1} parent=11 // pred_fallthru
        _
      // Predicated region
      $region41: #{tpu_custom_call.1} parent=11 // pred_check
        %p271 = pneg %p209
      $region42: #{tpu_custom_call.1} parent=11 // pred_check_branch
        %273 = sbr.rel (%p271) target = $region44
      $region43: #{tpu_custom_call.1} parent=11 // pred_region
        _
      $region44: #{tpu_custom_call.1} parent=11 // pred_fallthru
        _
    $region12: #{tpu_custom_call.1} parent=5 // pred_fallthru
      _
    %p274 = scmp.lt.s32.totalorder %s15, 2
    // Predicated region
    $region45: #{tpu_custom_call.1} parent=5 // pred_check
      %p275 = pneg %p274
    $region46: #{tpu_custom_call.1} parent=5 // pred_check_branch
      %277 = sbr.rel (%p275) target = $region48
    $region47: #{tpu_custom_call.1} parent=5 // pred_region
      // Predicated region
      $region49: #{tpu_custom_call.1} parent=47 // pred_check
        %p278 = pneg %p35
      $region50: #{tpu_custom_call.1} parent=47 // pred_check_branch
        %280 = sbr.rel (%p278) target = $region52
      $region51: #{tpu_custom_call.1} parent=47 // pred_region
        %p281 = scmp.lt.s32.totalorder %s15, 1
        %s282 = scalar_select %p281, %s15, 1
        %s283 = smul.addr %s282, 2
        %s284 = smul.addr %s283, 8
        %s285 = scalar_lea.vmem %s0, %s284
      $region52: #{tpu_custom_call.1} parent=47 // pred_fallthru
        _
    $region48: #{tpu_custom_call.1} parent=5 // pred_fallthru
      _
    %p286 = scmp.le.s32.totalorder 1, %s15
    %p287 = scmp.lt.s32.totalorder %s15, 3
    %p288 = pnand %p286, %p287
    %p289 = pneg %p288
    // Predicated region
    $region53: #{tpu_custom_call.1} parent=5 // pred_check
      _
    $region54: #{tpu_custom_call.1} parent=5 // pred_check_branch
      %291 = sbr.rel (%p288) target = $region56
    $region55: #{tpu_custom_call.1} parent=5 // pred_region
      %s292 = ssub.s32 %s15, 1
      %p293 = scmp.lt.s32.totalorder %s20, 1
      %s294 = scalar_select %p293, %s20, 1
      %s295 = smul.addr %s294, 2
      %s296 = smul.addr %s295, 8
      %s297 = scalar_lea.vmem %s0, %s296
      %p298 = pneg %p41
      %p299 = pneg %p38
      %p300 = pneg %p62
      %p301 = pneg %p59
      %p302 = pneg %p83
      %p303 = pneg %p80
      %p304 = pneg %p104
      %p305 = pneg %p101
      %p306 = pneg %p125
      %p307 = pneg %p122
      %p308 = pneg %p146
      %p309 = pneg %p143
      %p310 = pneg %p167
      %p311 = pneg %p164
      %p312 = pneg %p188
      %p313 = pneg %p185
      %p314 = pneg %p209
      %p315 = pneg %p206
      %p316 = pneg %p235
      %p317 = pneg %p232
      %p318 = scmp.lt.s32.totalorder %s20, 1
      %s319 = scalar_select %p318, %s20, 1
      %s320 = smul.addr %s319, 2
      %s321 = smul.addr %s320, 8
      %s322 = scalar_lea.vmem %s9, %s321
      %p323 = scmp.lt.s32.totalorder %s20, 1
      %s324 = scalar_select %p323, %s20, 1
      %s325 = smul.addr %s324, 2
      %s326 = smul.addr %s325, 8
      %s327 = scalar_lea.vmem %s0, %s326
      %p328 = scmp.lt.s32.totalorder %s20, 1
      %s329 = scalar_select %p328, %s20, 1
      %s330 = smul.addr %s329, 2
      %s331 = smul.addr %s330, 8
      %s332 = scalar_lea.vmem %s9, %s331
      %v334 = vld [vmem:[%s327] sm:$0xff]
      %v335 = vld [vmem:[%s327 + $0x8] sm:$0xff]
      loop: start=0, step=1, limit=2
      $region57: #{tpu_custom_call.1} parent=55 // loop_pre_header
        _
      $region58: #{tpu_custom_call.1} parent=55 // loop_header
        %s337 = sphi 0, %s341
        %p338 = scmp.ge.s32.totalorder %s337, 2
        %v342 = vphi %v334, %v748
        %v343 = vphi %v335, %v749
      $region59: #{tpu_custom_call.1} parent=55 // loop_header_branch
        %340 = sbr.rel (%p338) target = $region63
      $region60: #{tpu_custom_call.1} parent=55 // loop_body
        %s344 = smul.u32 %s337, 4
        %s345 = smul.addr %s344, 4
        %s346 = scalar_lea.vmem %s1, %s345
        %v347 = vld [vmem:[%s346] sm:$0xf]
        %v348 = vld [vmem:[%s346 + $0x4] sm:$0xf]
        %v349 = vld [vmem:[%s346 + $0x8] sm:$0xf]
        %v350 = vld [vmem:[%s346 + $0xc] sm:$0xf]
        %s351 = smul.u32 %s337, 2
        %s352 = smul.addr %s351, 4
        %s353 = scalar_lea.vmem %s2, %s352
        %v354 = vld [vmem:[%s353] sm:$0xf]
        %v355 = vld [vmem:[%s353 + $0x4] sm:$0xf]
        %s356 = smul.addr %s337, 4
        %s357 = scalar_lea.vmem %s3, %s356
        %v358 = vld [vmem:[%s357] sm:$0xf]
        %s359 = smul.addr %s344, 4
        %s360 = scalar_lea.vmem %s4, %s359
        %v361 = vld [vmem:[%s360] sm:$0xf]
        %v362 = vld [vmem:[%s360 + $0x4] sm:$0xf]
        %v363 = vld [vmem:[%s360 + $0x8] sm:$0xf]
        %v364 = vld [vmem:[%s360 + $0xc] sm:$0xf]
        %s365 = smul.u32 %s337, 32
        %s366 = scalar_lea.vmem %s5, %s365
        %v367 = vld [vmem:[%s366] sm:$0xff]
        %v368 = vld [vmem:[%s366 + $0x8] sm:$0xff]
        %v369 = vld [vmem:[%s366 + $0x10] sm:$0xff]
        %v370 = vld [vmem:[%s366 + $0x18] sm:$0xff]
        %s371 = smul.u32 %s337, 16
        %s372 = scalar_lea.vmem %s6, %s371
        %v373 = vld [vmem:[%s372] sm:$0xff]
        %v374 = vld [vmem:[%s372 + $0x8] sm:$0xff]
        %s375 = scalar_lea.vmem %s7, %s344
        %v376 = vld [vmem:[%s375] sm:$0x7]
        %s377 = scalar_lea.vmem %s8, %s337
        %v378 = vld [vmem:[%s377] sm:$0x1]
        %vm379 = vcmask 64512
        %v380 = vsel %vm379, %v342, 0.0
        %v381 = vsel %vm379, %v343, 0.0
        %v382 = vadd.f32 %v380, %v381
        %v383 = vrot.slane %v382, 4
        %v384 = vadd.f32 %v382, %v383
        %v385 = vrot.slane %v384, 2
        %v386 = vadd.f32 %v384, %v385
        %v387 = vrot.slane %v386, 1
        %v388 = vadd.f32 %v386, %v387
        %v389 = vmul.f32 %v342, %v342
        %v390 = vmul.f32 %v343, %v343
        %v391 = vsel %vm379, %v389, 0.0
        %v392 = vsel %vm379, %v390, 0.0
        %v393 = vadd.f32 %v391, %v392
        %v394 = vrot.slane %v393, 4
        %v395 = vadd.f32 %v393, %v394
        %v396 = vrot.slane %v395, 2
        %v397 = vadd.f32 %v395, %v396
        %v398 = vrot.slane %v397, 1
        %v399 = vadd.f32 %v397, %v398
        %v400 = vmul.f32 %v388, 0.0625
        %v401 = vmul.f32 %v399, 0.0625
        %v402 = vmul.f32 %v400, %v400
        %v403 = vsub.f32 %v401, %v402
        %v404 = vmax.f32 %v403, 0.0
        %v405 = vsub.f32 %v342, %v400
        %v406 = vsub.f32 %v343, %v400
        %v407 = vadd.f32 %v404, 1e-05
        %v408 = vrsqrt.pop %v407
        %v409 = vmul.f32 %v405, %v408
        %v410 = vmul.f32 %v406, %v408
        %412 = vset.pattern.permute.xlu0 0
        %413 = vperm.xlu0 %412, %v373
        %v414 = vpop.permute.xlu0 %413
        %417 = vset.pattern.permute.xlu0 0
        %418 = vperm.xlu0 %417, %v374
        %v419 = vpop.permute.xlu0 %418
        %v421 = vmul.f32 %v409, %v414
        %v422 = vmul.f32 %v410, %v419
        %423 = vset.pattern.permute.xlu0 1
        %424 = vperm.xlu0 %423, %v373
        %v425 = vpop.permute.xlu0 %424
        %427 = vset.pattern.permute.xlu0 1
        %428 = vperm.xlu0 %427, %v374
        %v429 = vpop.permute.xlu0 %428
        %v431 = vadd.f32 %v421, %v425
        %v432 = vadd.f32 %v422, %v429
        %v433 = vpack.c.bf16 %v432, %v431
        %435 = vset.pattern.permute.xlu0 0
        %436 = vperm.xlu0 %435, %v367
        %v437 = vpop.permute.xlu0 %436
        %440 = vset.pattern.permute.xlu0 0
        %441 = vperm.xlu0 %440, %v368
        %v442 = vpop.permute.xlu0 %441
        %445 = vset.pattern.permute.xlu0 0
        %446 = vperm.xlu0 %445, %v369
        %v447 = vpop.permute.xlu0 %446
        %450 = vset.pattern.permute.xlu0 0
        %451 = vperm.xlu0 %450, %v370
        %v452 = vpop.permute.xlu0 %451
        %v458 = vunpack.c.l.b16 %v347
        %v459 = vunpack.c.l.b16 %v348
        %v460 = vunpack.c.l.b16 %v349
        %v461 = vunpack.c.l.b16 %v350
        %v462 = vpack.c.b16 %v459, %v458
        %v463 = vpack.c.b16 %v461, %v460
        %vm464 = vcmask 130048
        %v466 = vsel %vm464, %v462, 0
        %v469 = vsel %vm464, %v463, 0
        %471 = vmatprep.subr.bf16.mxu0 0
        %472 = vmatpush1.bf16.msra.mxu0 0
        %473 = vmatprep.subr.bf16.mxu0 0
        %474 = vmatpush1.bf16.msra.mxu0 0
        %475 = vmatprep.subr.bf16.mxu0 0
        %476 = vmatpush1.bf16.msra.mxu0 0
        %477 = vmatprep.subr.bf16.mxu0 0
        %478 = vmatpush1.bf16.msra.mxu0 0
        %479 = vmatprep.subr.bf16.mxu0 0
        %480 = vmatpush1.bf16.msra.mxu0 0
        %481 = vmatprep.subr.bf16.mxu0 0
        %482 = vmatpush1.bf16.msra.mxu0 0
        %483 = vmatprep.subr.bf16.mxu0 0
        %484 = vmatpush1.bf16.msra.mxu0 0
        %485 = vmatprep.subr.bf16.mxu0 0
        %486 = vmatpush1.bf16.msra.mxu0 %v433
        %487 = vmatprep.subr.bf16.mxu0 0
        %488 = vmatpush2.bf16.msra.mxu0 0
        %489 = vmatprep.subr.bf16.mxu0 0
        %490 = vmatpush2.bf16.msra.mxu0 0
        %491 = vmatprep.subr.bf16.mxu0 0
        %492 = vmatpush2.bf16.msra.mxu0 0
        %493 = vmatprep.subr.bf16.mxu0 0
        %494 = vmatpush2.bf16.msra.mxu0 0
        %495 = vmatprep.subr.bf16.mxu0 0
        %496 = vmatpush2.bf16.msra.mxu0 0
        %497 = vmatprep.subr.bf16.mxu0 0
        %498 = vmatpush2.bf16.msra.mxu0 0
        %499 = vmatprep.subr.bf16.mxu0 0
        %500 = vmatpush2.bf16.msra.mxu0 0
        %501 = vmatprep.subr.bf16.mxu0 0
        %502 = vmatpush2.bf16.msra.mxu0 0
        %503 = vmatprep.mubr.bf16.mxu0 0
        %504 = vmatmul.mubr.bf16.gmra.mxu0 %v466
        %v505 = vpop.f32.mrf.mxu0
        %v506 = vadd.f32 %v437, %v505
        %v507 = vpop.f32.mrf.mxu0
        %v508 = vpop.f32.mrf.mxu0
        %v509 = vadd.f32 %v442, %v508
        %v510 = vpop.f32.mrf.mxu0
        %511 = vmatprep.mubr.bf16.mxu0 0
        %512 = vmatmul.mubr.bf16.gmra.mxu0 %v469
        %v513 = vpop.f32.mrf.mxu0
        %v514 = vadd.f32 %v447, %v513
        %v515 = vpop.f32.mrf.mxu0
        %v516 = vpop.f32.mrf.mxu0
        %v517 = vadd.f32 %v452, %v516
        %v518 = vpop.f32.mrf.mxu0
        %519 = vdwg.mxu0
        %v520 = vmax.f32 %v506, 0.0
        %v521 = vmax.f32 %v509, 0.0
        %v522 = vmax.f32 %v514, 0.0
        %v523 = vmax.f32 %v517, 0.0
        %v524 = vpack.c.bf16 %v521, %v520
        %v525 = vpack.c.bf16 %v523, %v522
        %526 = vset.pattern.permute.xlu0 2
        %527 = vperm.xlu0 %526, %v373
        %v528 = vpop.permute.xlu0 %527
        %530 = vset.pattern.permute.xlu0 2
        %531 = vperm.xlu0 %530, %v374
        %v532 = vpop.permute.xlu0 %531
        %v536 = vunpack.c.l.b16 %v354
        %v537 = vunpack.c.l.b16 %v355
        %v538 = vpack.c.b16 %v537, %v536
        %vm539 = vcmask 261120
        %v541 = vsel %vm539, %v538, 0
        %543 = vmatprep.subr.bf16.mxu0 0
        %544 = vmatpush1.bf16.msra.mxu0 0
        %545 = vmatprep.subr.bf16.mxu0 0
        %546 = vmatpush1.bf16.msra.mxu0 0
        %547 = vmatprep.subr.bf16.mxu0 0
        %548 = vmatpush1.bf16.msra.mxu0 0
        %549 = vmatprep.subr.bf16.mxu0 0
        %550 = vmatpush1.bf16.msra.mxu0 0
        %551 = vmatprep.subr.bf16.mxu0 0
        %552 = vmatpush1.bf16.msra.mxu0 0
        %553 = vmatprep.subr.bf16.mxu0 0
        %554 = vmatpush1.bf16.msra.mxu0 0
        %555 = vmatprep.subr.bf16.mxu0 0
        %556 = vmatpush1.bf16.msra.mxu0 %v525
        %557 = vmatprep.subr.bf16.mxu0 0
        %558 = vmatpush1.bf16.msra.mxu0 %v524
        %559 = vmatprep.subr.bf16.mxu0 0
        %560 = vmatpush2.bf16.msra.mxu0 0
        %561 = vmatprep.subr.bf16.mxu0 0
        %562 = vmatpush2.bf16.msra.mxu0 0
        %563 = vmatprep.subr.bf16.mxu0 0
        %564 = vmatpush2.bf16.msra.mxu0 0
        %565 = vmatprep.subr.bf16.mxu0 0
        %566 = vmatpush2.bf16.msra.mxu0 0
        %567 = vmatprep.subr.bf16.mxu0 0
        %568 = vmatpush2.bf16.msra.mxu0 0
        %569 = vmatprep.subr.bf16.mxu0 0
        %570 = vmatpush2.bf16.msra.mxu0 0
        %571 = vmatprep.subr.bf16.mxu0 0
        %572 = vmatpush2.bf16.msra.mxu0 0
        %573 = vmatprep.subr.bf16.mxu0 0
        %574 = vmatpush2.bf16.msra.mxu0 0
        %575 = vmatprep.mubr.bf16.mxu0 0
        %576 = vmatmul.mubr.bf16.gmra.mxu0 %v541
        %v577 = vpop.f32.mrf.mxu0
        %v578 = vadd.f32 %v528, %v577
        %v579 = vpop.f32.mrf.mxu0
        %v580 = vpop.f32.mrf.mxu0
        %v581 = vadd.f32 %v532, %v580
        %v582 = vpop.f32.mrf.mxu0
        %583 = vdwg.mxu0
        %v584 = vadd.f32 %v578, %v342
        %v585 = vadd.f32 %v581, %v343
        %v586 = vsel %vm379, %v584, 0.0
        %587 = vadd.xlane.f32.xlu0 %v586
        %v588 = vpop.xlane.xlu0 %587
        %v589 = vsel %vm379, %v585, 0.0
        %590 = vadd.xlane.f32.xlu0 %v589
        %v591 = vpop.xlane.xlu0 %590
        %v592 = vmul.f32 %v584, %v584
        %v593 = vmul.f32 %v585, %v585
        %v594 = vsel %vm379, %v592, 0.0
        %595 = vadd.xlane.f32.xlu0 %v594
        %v596 = vpop.xlane.xlu0 %595
        %v597 = vsel %vm379, %v593, 0.0
        %598 = vadd.xlane.f32.xlu0 %v597
        %v599 = vpop.xlane.xlu0 %598
        %v600 = vmul.f32 %v588, 0.125
        %v601 = vmul.f32 %v591, 0.125
        %v602 = vmul.f32 %v596, 0.125
        %v603 = vmul.f32 %v599, 0.125
        %v604 = vmul.f32 %v600, %v600
        %v605 = vmul.f32 %v601, %v601
        %v606 = vsub.f32 %v602, %v604
        %v607 = vsub.f32 %v603, %v605
        %v608 = vmax.f32 %v606, 0.0
        %v609 = vmax.f32 %v607, 0.0
        %v610 = vsub.f32 %v584, %v600
        %v611 = vsub.f32 %v585, %v601
        %v612 = vadd.f32 %v608, 1e-05
        %v613 = vadd.f32 %v609, 1e-05
        %v614 = vrsqrt.pop %v612
        %v615 = vrsqrt.pop %v613
        %v616 = vmul.f32 %v610, %v614
        %v617 = vmul.f32 %v611, %v615
        %v618 = vlaneseq
        %v619 = vshrl.u32 %v618, 7
        %v620 = vsub.s32 0, %v619
        %v621 = vrot.slane %v376, %v620
        %v622 = vmul.f32 %v616, %v621
        %v623 = vmul.f32 %v617, %v621
        %v624 = vlaneseq
        %v625 = vshrl.u32 %v624, 7
        %v626 = vsub.s32 1, %v625
        %v627 = vrot.slane %v376, %v626
        %v628 = vadd.f32 %v622, %v627
        %v629 = vadd.f32 %v623, %v627
        %v630 = vpack.c.bf16 %v629, %v628
        %v632 = vlaneseq
        %v633 = vshrl.u32 %v632, 7
        %v634 = vsub.s32 0, %v633
        %v635 = vrot.slane %v378, %v634
        %v638 = vsel %vm379, %v630, 0
        %vm640 = vcmask 1043456
        %v642 = vsel %vm640, %v358, 0
        %644 = vmatprep.subr.bf16.mxu0 0
        %645 = vmatpush1.bf16.msra.mxu0 0
        %646 = vmatprep.subr.bf16.mxu0 0
        %647 = vmatpush1.bf16.msra.mxu0 0
        %648 = vmatprep.subr.bf16.mxu0 0
        %649 = vmatpush1.bf16.msra.mxu0 0
        %650 = vmatprep.subr.bf16.mxu0 0
        %651 = vmatpush1.bf16.msra.mxu0 0
        %652 = vmatprep.subr.bf16.mxu0 0
        %653 = vmatpush1.bf16.msra.mxu0 0
        %654 = vmatprep.subr.bf16.mxu0 0
        %655 = vmatpush1.bf16.msra.mxu0 0
        %656 = vmatprep.subr.bf16.mxu0 0
        %657 = vmatpush1.bf16.msra.mxu0 0
        %658 = vmatprep.subr.bf16.mxu0 0
        %659 = vmatpush1.bf16.msra.mxu0 %v642
        %660 = vmatprep.subr.bf16.mxu0 0
        %661 = vmatpush2.bf16.msra.mxu0 0
        %662 = vmatprep.subr.bf16.mxu0 0
        %663 = vmatpush2.bf16.msra.mxu0 0
        %664 = vmatprep.subr.bf16.mxu0 0
        %665 = vmatpush2.bf16.msra.mxu0 0
        %666 = vmatprep.subr.bf16.mxu0 0
        %667 = vmatpush2.bf16.msra.mxu0 0
        %668 = vmatprep.subr.bf16.mxu0 0
        %669 = vmatpush2.bf16.msra.mxu0 0
        %670 = vmatprep.subr.bf16.mxu0 0
        %671 = vmatpush2.bf16.msra.mxu0 0
        %672 = vmatprep.subr.bf16.mxu0 0
        %673 = vmatpush2.bf16.msra.mxu0 0
        %674 = vmatprep.subr.bf16.mxu0 0
        %675 = vmatpush2.bf16.msra.mxu0 0
        %676 = vmatprep.mubr.bf16.mxu0 0
        %677 = vmatmul.mubr.bf16.gmra.mxu0 %v638
        %v678 = vpop.f32.mrf.mxu0
        %v679 = vadd.f32 %v635, %v678
        %v680 = vpop.f32.mrf.mxu0
        %v681 = vpop.f32.mrf.mxu0
        %v682 = vadd.f32 %v635, %v681
        %v683 = vpop.f32.mrf.mxu0
        %684 = vdwg.mxu0
        %v685 = vmax.f32 %v679, 0.0
        %v686 = vmax.f32 %v682, 0.0
        %v687 = vpack.c.bf16 %v686, %v685
        %v688 = vlaneseq
        %v689 = vshrl.u32 %v688, 7
        %v690 = vsub.s32 2, %v689
        %v691 = vrot.slane %v376, %v690
        %v696 = vunpack.c.l.b16 %v361
        %v697 = vunpack.c.l.b16 %v362
        %v698 = vunpack.c.l.b16 %v363
        %v699 = vunpack.c.l.b16 %v364
        %v700 = vpack.c.b16 %v697, %v696
        %v701 = vpack.c.b16 %v699, %v698
        %v705 = vsel %vm539, %v687, 0
        %707 = vmatprep.subr.bf16.mxu0 0
        %708 = vmatpush1.bf16.msra.mxu0 0
        %709 = vmatprep.subr.bf16.mxu0 0
        %710 = vmatpush1.bf16.msra.mxu0 0
        %711 = vmatprep.subr.bf16.mxu0 0
        %712 = vmatpush1.bf16.msra.mxu0 0
        %713 = vmatprep.subr.bf16.mxu0 0
        %714 = vmatpush1.bf16.msra.mxu0 0
        %715 = vmatprep.subr.bf16.mxu0 0
        %716 = vmatpush1.bf16.msra.mxu0 0
        %717 = vmatprep.subr.bf16.mxu0 0
        %718 = vmatpush1.bf16.msra.mxu0 0
        %719 = vmatprep.subr.bf16.mxu0 0
        %720 = vmatpush1.bf16.msra.mxu0 %v701
        %721 = vmatprep.subr.bf16.mxu0 0
        %722 = vmatpush1.bf16.msra.mxu0 %v700
        %723 = vmatprep.subr.bf16.mxu0 0
        %724 = vmatpush2.bf16.msra.mxu0 0
        %725 = vmatprep.subr.bf16.mxu0 0
        %726 = vmatpush2.bf16.msra.mxu0 0
        %727 = vmatprep.subr.bf16.mxu0 0
        %728 = vmatpush2.bf16.msra.mxu0 0
        %729 = vmatprep.subr.bf16.mxu0 0
        %730 = vmatpush2.bf16.msra.mxu0 0
        %731 = vmatprep.subr.bf16.mxu0 0
        %732 = vmatpush2.bf16.msra.mxu0 0
        %733 = vmatprep.subr.bf16.mxu0 0
        %734 = vmatpush2.bf16.msra.mxu0 0
        %735 = vmatprep.subr.bf16.mxu0 0
        %736 = vmatpush2.bf16.msra.mxu0 0
        %737 = vmatprep.subr.bf16.mxu0 0
        %738 = vmatpush2.bf16.msra.mxu0 0
        %739 = vmatprep.mubr.bf16.mxu0 0
        %740 = vmatmul.mubr.bf16.gmra.mxu0 %v705
        %v741 = vpop.f32.mrf.mxu0
        %v742 = vadd.f32 %v691, %v741
        %v743 = vpop.f32.mrf.mxu0
        %v744 = vpop.f32.mrf.mxu0
        %v745 = vadd.f32 %v691, %v744
        %v746 = vpop.f32.mrf.mxu0
        %747 = vdwg.mxu0
        %v748 = vadd.f32 %v742, %v584
        %v749 = vadd.f32 %v745, %v585
      $region61: #{tpu_custom_call.1} parent=55 // loop_footer
        %s341 = sadd.s32 1, %s337
      $region62: #{tpu_custom_call.1} parent=55 // loop_footer_branch
        %336 = sbr.rel target = $region58
      $region63: #{tpu_custom_call.1} parent=55 // loop_exit
        _
      %vm750 = vcmask 64512
      %751 = vst.msk [vmem:[%s332] sm:$0xff] %vm750, %v342
      %752 = vst.msk [vmem:[%s332 + $0x8] sm:$0xff] %vm750, %v343
      %p753 = scmp.lt.s32.totalorder %s20, 1
      %s754 = scalar_select %p753, %s20, 1
      %s755 = smul.addr %s754, 2
      %s756 = smul.addr %s755, 8
      %s757 = scalar_lea.vmem %s9, %s756
      // Predicated region
      $region64: #{tpu_custom_call.1} parent=55 // pred_check
        %p758 = pneg %p232
      $region65: #{tpu_custom_call.1} parent=55 // pred_check_branch
        %760 = sbr.rel (%p758) target = $region67
      $region66: #{tpu_custom_call.1} parent=55 // pred_region
        _
      $region67: #{tpu_custom_call.1} parent=55 // pred_fallthru
        _
    $region56: #{tpu_custom_call.1} parent=5 // pred_fallthru
      _
    %p761 = scmp.le.s32.totalorder 2, %s15
    // Predicated region
    $region68: #{tpu_custom_call.1} parent=5 // pred_check
      %p762 = pneg %p761
    $region69: #{tpu_custom_call.1} parent=5 // pred_check_branch
      %764 = sbr.rel (%p762) target = $region71
    $region70: #{tpu_custom_call.1} parent=5 // pred_region
      %s765 = ssub.s32 %s15, 2
      // Predicated region
      $region72: #{tpu_custom_call.1} parent=70 // pred_check
        %p766 = pneg %p238
      $region73: #{tpu_custom_call.1} parent=70 // pred_check_branch
        %768 = sbr.rel (%p766) target = $region75
      $region74: #{tpu_custom_call.1} parent=70 // pred_region
        %p769 = scmp.lt.s32.totalorder %s21, 1
        %s770 = scalar_select %p769, %s21, 1
        %s771 = smul.addr %s770, 2
        %s772 = smul.addr %s771, 8
        %s773 = scalar_lea.vmem %s9, %s772
      $region75: #{tpu_custom_call.1} parent=70 // pred_fallthru
        _
    $region71: #{tpu_custom_call.1} parent=5 // pred_fallthru
      _
  $region6: #{tpu_custom_call.1} parent=0 // loop_footer
    %s19 = sadd.s32 1, %s15
  $region7: #{tpu_custom_call.1} parent=0 // loop_footer_branch
    %14 = sbr.rel target = $region3
  $region8: #{tpu_custom_call.1} parent=0 // loop_exit
    _

</llo_original>
